<compile_context>
chip_gen: v7x
topology: tpu7x:2x2x1
jax: 0.10.0
libtpu: 0.0.40
codegen_flags: <defaults>
</compile_context>

<pallas_src>
import math
from functools import partial

import jax
import jax.numpy as jnp
from jax import lax
from jax.experimental import pallas as pl
from jax.experimental.pallas import tpu as pltpu


def mhsa_kernel(x_ref, wqv_ref, bqv_ref, w2t_ref, b2_ref, o_ref, att_acc,
                *, num_heads, head_dim, embed_dim):
    x = x_ref[...]                                          # (S, E), native dtype

    # Fused Q/V projection: (S, E) @ (E, 2E) -> f32 (S, 2E).
    # Columns [0:E] are Q (softmax scale pre-folded), [E:2E] are V, head-major.
    qv = jnp.dot(x, wqv_ref[...], preferred_element_type=jnp.float32)
    qv = qv + bqv_ref[...]                                  # bias added in f32
    qv_lo = qv.astype(x.dtype)                              # MXU operands in native dtype

    E, hd = embed_dim, head_dim
    # TODO(synk): for large S (>= ~1024) switch to flash-style query tiling with an
    # online softmax instead of materializing full (S, S) scores per head.
    for h in range(num_heads):
        q = qv_lo[:, h * hd:(h + 1) * hd]                   # (S, hd)
        v = qv_lo[:, E + h * hd:E + (h + 1) * hd]           # (S, hd)

        # scores = Q @ V^T: contract last dims of both; no materialized transpose.
        scores = lax.dot_general(
            q, v, dimension_numbers=(((1,), (1,)), ((), ())),
            preferred_element_type=jnp.float32)             # (S, S) f32

        m = jnp.max(scores, axis=-1, keepdims=True)
        p = jnp.exp(scores - m)                             # unnormalized probs
        row_sum = jnp.sum(p, axis=-1, keepdims=True)        # (S, 1)

        acc = jnp.dot(p.astype(x.dtype), v,
                      preferred_element_type=jnp.float32)   # (S, hd) f32
        inv = pl.reciprocal(row_sum)                        # exact; approx=True ok for bf16 out
        att_acc[:, h * hd:(h + 1) * hd] = acc * inv         # slab store, no concat

    att = att_acc[...].astype(x.dtype)                      # (S, E)
    out = jnp.dot(att, w2t_ref[...], preferred_element_type=jnp.float32)
    out = out + b2_ref[...]
    o_ref[...] = out.astype(o_ref.dtype)


def prepare_mhsa_params(w1, b1, w2, b2, *, num_heads):
    """One-time (hoisted) weight reorder: drop dead K columns, fold scale into Q."""
    three_e, E = w1.shape
    hd = E // num_heads
    scale = 1.0 / math.sqrt(hd)

    w1r = w1.reshape(num_heads, 3, hd, E)                   # (H, {K,Q,V}, hd, E)
    b1r = b1.reshape(num_heads, 3, hd)
    wq = w1r[:, 1].reshape(E, E)                            # head-major Q out-features
    wv = w1r[:, 2].reshape(E, E)                            # head-major V out-features
    bq = b1r[:, 1].reshape(E)
    bv = b1r[:, 2].reshape(E)

    # (E_in, 2E_out) = [Q_all * scale | V_all]; scale folded into weights + bias.
    wqv_t = jnp.concatenate([wq.T * scale, wv.T], axis=1)
    bqv = jnp.concatenate([bq * scale, bv]).reshape(1, 2 * E).astype(jnp.float32)
    w2t = jnp.transpose(w2)                                 # (E, E)
    b2r = b2.reshape(1, E).astype(jnp.float32)
    return wqv_t, bqv, w2t, b2r


@partial(jax.jit, static_argnames=("num_heads",))
def multi_head_self_attention(x, wqv_t, bqv, w2t, b2r, *, num_heads):
    B, S, E = x.shape
    hd = E // num_heads

    kernel = partial(mhsa_kernel, num_heads=num_heads, head_dim=hd, embed_dim=E)
    return pl.pallas_call(
        kernel,
        out_shape=jax.ShapeDtypeStruct((B, S, E), x.dtype),
        grid_spec=pltpu.PrefetchScalarGridSpec(
            num_scalar_prefetch=0,
            grid=(B,),
            in_specs=[
                pl.BlockSpec((None, S, E), lambda b: (b, 0, 0)),  # one batch element
                pl.BlockSpec((E, 2 * E), lambda b: (0, 0)),       # [Q|V] fused weight^T
                pl.BlockSpec((1, 2 * E), lambda b: (0, 0)),       # [Q|V] bias (f32)
                pl.BlockSpec((E, E), lambda b: (0, 0)),           # proj2 weight^T
                pl.BlockSpec((1, E), lambda b: (0, 0)),           # proj2 bias (f32)
            ],
            out_specs=pl.BlockSpec((None, S, E), lambda b: (b, 0, 0)),
            scratch_shapes=[pltpu.VMEM((S, E), jnp.float32)],     # head-output slab
        ),
        # Batch steps are independent -> "parallel" lets v7x split grid steps
        # across its two TensorCores; harmless on single-TC v5e/v6e.
        compiler_params=pltpu.CompilerParams(dimension_semantics=("parallel",)),
    )(x, wqv_t, bqv, w2t, b2r)


def ref_forward(x, w1, b1, w2, b2, num_heads):
    """Pure-JAX transcription of the PyTorch forward for verification."""
    B, S, E = x.shape
    hd = E // num_heads
    y = x @ w1.T + b1                                   # (B, S, 3E)
    y = y.reshape(B, S, num_heads, -1)                  # (B, S, H, 3hd)
    y = jnp.transpose(y, (0, 2, 1, 3))                  # (B, H, S, 3hd)
    K, Q, V = jnp.split(y, 3, axis=3)
    scores = jnp.einsum("bhqd,bhkd->bhqk", Q, V) / math.sqrt(hd)
    att = jax.nn.softmax(scores, axis=-1)
    att = jnp.einsum("bhqk,bhkd->bhqd", att, V)
    att = jnp.transpose(att, (0, 2, 1, 3)).reshape(B, S, E)
    return att @ w2.T + b2


if __name__ == "__main__":
    # Small shapes consistent with the module: embed_dim=32, num_heads=4, seq=8, batch=2.
    B, S, E, H = 2, 8, 32, 4

    key = jax.random.PRNGKey(0)
    kx, k1, kb1, k2, kb2 = jax.random.split(key, 5)

    x = jax.random.normal(kx, (B, S, E), dtype=jnp.float32)

    # Deterministic "nn.Linear"-style parameters.
    bound1 = 1.0 / math.sqrt(E)
    w1 = jax.random.uniform(k1, (3 * E, E), dtype=jnp.float32, minval=-bound1, maxval=bound1)
    b1 = jax.random.uniform(kb1, (3 * E,), dtype=jnp.float32, minval=-bound1, maxval=bound1)
    w2 = jax.random.uniform(k2, (E, E), dtype=jnp.float32, minval=-bound1, maxval=bound1)
    b2 = jax.random.uniform(kb2, (E,), dtype=jnp.float32, minval=-bound1, maxval=bound1)

    # Weight reorder / transpose hoisted out of the hot path (done once).
    params = prepare_mhsa_params(w1, b1, w2, b2, num_heads=H)

    out = multi_head_self_attention(x, *params, num_heads=H)
    out = jax.block_until_ready(out)

    ref = ref_forward(x, w1, b1, w2, b2, H)
    assert out.shape == (B, S, E)
    assert jnp.allclose(out, ref, atol=1e-4, rtol=1e-4), "mismatch vs pure-JAX reference"

    print("KERNEL_OK")
</pallas_src>

<mosaic_0001>
module attributes {stable_mosaic.version = 11 : i64} {
  func.func @mhsa_kernel(%arg0: i32, %arg1: memref<1x8x32xf32, #tpu.memory_space<vmem>>, %arg2: memref<32x64xf32, #tpu.memory_space<vmem>>, %arg3: memref<1x64xf32, #tpu.memory_space<vmem>>, %arg4: memref<32x32xf32, #tpu.memory_space<vmem>>, %arg5: memref<1x32xf32, #tpu.memory_space<vmem>>, %arg6: memref<1x8x32xf32, #tpu.memory_space<vmem>>, %arg7: memref<8x32xf32, #tpu.memory_space<vmem>>) attributes {dimension_semantics = [#tpu.dimension_semantics<parallel>], iteration_bounds = array<i64: 2>, scalar_prefetch = 0 : i64, scratch_operands = 1 : i64, tpu.core_type = #tpu.core_type<tc>, window_params = [{transform_indices = @transform_0, window_bounds = array<i64: 1, 8, 32>}, {pipeline_mode = #tpu.pipeline_mode<synchronous>, transform_indices = @transform_1, window_bounds = array<i64: 32, 64>}, {pipeline_mode = #tpu.pipeline_mode<synchronous>, transform_indices = @transform_2, window_bounds = array<i64: 1, 64>}, {pipeline_mode = #tpu.pipeline_mode<synchronous>, transform_indices = @transform_3, window_bounds = array<i64: 32, 32>}, {pipeline_mode = #tpu.pipeline_mode<synchronous>, transform_indices = @transform_4, window_bounds = array<i64: 1, 32>}, {transform_indices = @transform_5, window_bounds = array<i64: 1, 8, 32>}]} {
    %c0 = arith.constant 0 : index
    %c0_0 = arith.constant 0 : index
    %c0_1 = arith.constant 0 : index
    %0 = vector.load %arg1[%c0, %c0_0, %c0_1] : memref<1x8x32xf32, #tpu.memory_space<vmem>>, vector<1x8x32xf32>
    %1 = vector.shape_cast %0 : vector<1x8x32xf32> to vector<8x32xf32>
    %c0_2 = arith.constant 0 : index
    %c0_3 = arith.constant 0 : index
    %2 = vector.load %arg2[%c0_2, %c0_3] : memref<32x64xf32, #tpu.memory_space<vmem>>, vector<32x64xf32>
    %cst = arith.constant dense<0.000000e+00> : vector<8x64xf32>
    %3 = tpu.matmul %1, %2, %cst {dimension_numbers = #tpu.dot_dimension_numbers<[1], [0], [0], [1], [0, 0, 1, 1], [], []>} : vector<8x32xf32>, vector<32x64xf32>, vector<8x64xf32> -> vector<8x64xf32>
    %c0_4 = arith.constant 0 : index
    %c0_5 = arith.constant 0 : index
    %4 = vector.load %arg3[%c0_4, %c0_5] : memref<1x64xf32, #tpu.memory_space<vmem>>, vector<1x64xf32>
    %5 = vector.broadcast %4 : vector<1x64xf32> to vector<8x64xf32>
    %6 = arith.addf %3, %5 : vector<8x64xf32>
    %7 = vector.extract_strided_slice %6 {offsets = [0, 0], sizes = [8, 8], strides = [1, 1]} : vector<8x64xf32> to vector<8x8xf32>
    %8 = vector.extract_strided_slice %6 {offsets = [0, 32], sizes = [8, 8], strides = [1, 1]} : vector<8x64xf32> to vector<8x8xf32>
    %cst_6 = arith.constant dense<0.000000e+00> : vector<8x8xf32>
    %9 = tpu.matmul %7, %8, %cst_6 {dimension_numbers = #tpu.dot_dimension_numbers<[1], [1], [0], [0], [0, 0, 1, 0], [], []>} : vector<8x8xf32>, vector<8x8xf32>, vector<8x8xf32> -> vector<8x8xf32>
    %cst_7 = arith.constant dense<0xFF800000> : vector<8xf32>
    %10 = vector.multi_reduction <maximumf>, %9, %cst_7 [1] : vector<8x8xf32> to vector<8xf32>
    %11 = vector.shape_cast %10 : vector<8xf32> to vector<8x1xf32>
    %12 = vector.broadcast %11 : vector<8x1xf32> to vector<8x8xf32>
    %13 = arith.subf %9, %12 : vector<8x8xf32>
    %14 = math.exp %13 : vector<8x8xf32>
    %cst_8 = arith.constant dense<0.000000e+00> : vector<8xf32>
    %15 = vector.multi_reduction <add>, %14, %cst_8 [1] : vector<8x8xf32> to vector<8xf32>
    %16 = vector.shape_cast %15 : vector<8xf32> to vector<8x1xf32>
    %cst_9 = arith.constant dense<0.000000e+00> : vector<8x8xf32>
    %17 = tpu.matmul %14, %8, %cst_9 {dimension_numbers = #tpu.dot_dimension_numbers<[1], [0], [0], [1], [0, 0, 1, 1], [], []>} : vector<8x8xf32>, vector<8x8xf32>, vector<8x8xf32> -> vector<8x8xf32>
    %18 = tpu.reciprocal %16 : vector<8x1xf32> -> vector<8x1xf32>
    %19 = vector.broadcast %18 : vector<8x1xf32> to vector<8x8xf32>
    %20 = arith.mulf %17, %19 : vector<8x8xf32>
    %c0_10 = arith.constant 0 : index
    %c0_11 = arith.constant 0 : index
    %21 = vector.load %arg7[%c0_10, %c0_11] : memref<8x32xf32, #tpu.memory_space<vmem>>, vector<8x8xf32>
    tpu.vector_store %arg7[%c0_10, %c0_11], %20 {strides = array<i32>} : memref<8x32xf32, #tpu.memory_space<vmem>>, vector<8x8xf32>,
    %22 = vector.extract_strided_slice %6 {offsets = [0, 8], sizes = [8, 8], strides = [1, 1]} : vector<8x64xf32> to vector<8x8xf32>
    %23 = vector.extract_strided_slice %6 {offsets = [0, 40], sizes = [8, 8], strides = [1, 1]} : vector<8x64xf32> to vector<8x8xf32>
    %cst_12 = arith.constant dense<0.000000e+00> : vector<8x8xf32>
    %24 = tpu.matmul %22, %23, %cst_12 {dimension_numbers = #tpu.dot_dimension_numbers<[1], [1], [0], [0], [0, 0, 1, 0], [], []>} : vector<8x8xf32>, vector<8x8xf32>, vector<8x8xf32> -> vector<8x8xf32>
    %cst_13 = arith.constant dense<0xFF800000> : vector<8xf32>
    %25 = vector.multi_reduction <maximumf>, %24, %cst_13 [1] : vector<8x8xf32> to vector<8xf32>
    %26 = vector.shape_cast %25 : vector<8xf32> to vector<8x1xf32>
    %27 = vector.broadcast %26 : vector<8x1xf32> to vector<8x8xf32>
    %28 = arith.subf %24, %27 : vector<8x8xf32>
    %29 = math.exp %28 : vector<8x8xf32>
    %cst_14 = arith.constant dense<0.000000e+00> : vector<8xf32>
    %30 = vector.multi_reduction <add>, %29, %cst_14 [1] : vector<8x8xf32> to vector<8xf32>
    %31 = vector.shape_cast %30 : vector<8xf32> to vector<8x1xf32>
    %cst_15 = arith.constant dense<0.000000e+00> : vector<8x8xf32>
    %32 = tpu.matmul %29, %23, %cst_15 {dimension_numbers = #tpu.dot_dimension_numbers<[1], [0], [0], [1], [0, 0, 1, 1], [], []>} : vector<8x8xf32>, vector<8x8xf32>, vector<8x8xf32> -> vector<8x8xf32>
    %33 = tpu.reciprocal %31 : vector<8x1xf32> -> vector<8x1xf32>
    %34 = vector.broadcast %33 : vector<8x1xf32> to vector<8x8xf32>
    %35 = arith.mulf %32, %34 : vector<8x8xf32>
    %c0_16 = arith.constant 0 : index
    %c8 = arith.constant 8 : index
    %36 = vector.load %arg7[%c0_16, %c8] : memref<8x32xf32, #tpu.memory_space<vmem>>, vector<8x8xf32>
    tpu.vector_store %arg7[%c0_16, %c8], %35 {strides = array<i32>} : memref<8x32xf32, #tpu.memory_space<vmem>>, vector<8x8xf32>,
    %37 = vector.extract_strided_slice %6 {offsets = [0, 16], sizes = [8, 8], strides = [1, 1]} : vector<8x64xf32> to vector<8x8xf32>
    %38 = vector.extract_strided_slice %6 {offsets = [0, 48], sizes = [8, 8], strides = [1, 1]} : vector<8x64xf32> to vector<8x8xf32>
    %cst_17 = arith.constant dense<0.000000e+00> : vector<8x8xf32>
    %39 = tpu.matmul %37, %38, %cst_17 {dimension_numbers = #tpu.dot_dimension_numbers<[1], [1], [0], [0], [0, 0, 1, 0], [], []>} : vector<8x8xf32>, vector<8x8xf32>, vector<8x8xf32> -> vector<8x8xf32>
    %cst_18 = arith.constant dense<0xFF800000> : vector<8xf32>
    %40 = vector.multi_reduction <maximumf>, %39, %cst_18 [1] : vector<8x8xf32> to vector<8xf32>
    %41 = vector.shape_cast %40 : vector<8xf32> to vector<8x1xf32>
    %42 = vector.broadcast %41 : vector<8x1xf32> to vector<8x8xf32>
    %43 = arith.subf %39, %42 : vector<8x8xf32>
    %44 = math.exp %43 : vector<8x8xf32>
    %cst_19 = arith.constant dense<0.000000e+00> : vector<8xf32>
    %45 = vector.multi_reduction <add>, %44, %cst_19 [1] : vector<8x8xf32> to vector<8xf32>
    %46 = vector.shape_cast %45 : vector<8xf32> to vector<8x1xf32>
    %cst_20 = arith.constant dense<0.000000e+00> : vector<8x8xf32>
    %47 = tpu.matmul %44, %38, %cst_20 {dimension_numbers = #tpu.dot_dimension_numbers<[1], [0], [0], [1], [0, 0, 1, 1], [], []>} : vector<8x8xf32>, vector<8x8xf32>, vector<8x8xf32> -> vector<8x8xf32>
    %48 = tpu.reciprocal %46 : vector<8x1xf32> -> vector<8x1xf32>
    %49 = vector.broadcast %48 : vector<8x1xf32> to vector<8x8xf32>
    %50 = arith.mulf %47, %49 : vector<8x8xf32>
    %c0_21 = arith.constant 0 : index
    %c16 = arith.constant 16 : index
    %51 = vector.load %arg7[%c0_21, %c16] : memref<8x32xf32, #tpu.memory_space<vmem>>, vector<8x8xf32>
    tpu.vector_store %arg7[%c0_21, %c16], %50 {strides = array<i32>} : memref<8x32xf32, #tpu.memory_space<vmem>>, vector<8x8xf32>,
    %52 = vector.extract_strided_slice %6 {offsets = [0, 24], sizes = [8, 8], strides = [1, 1]} : vector<8x64xf32> to vector<8x8xf32>
    %53 = vector.extract_strided_slice %6 {offsets = [0, 56], sizes = [8, 8], strides = [1, 1]} : vector<8x64xf32> to vector<8x8xf32>
    %cst_22 = arith.constant dense<0.000000e+00> : vector<8x8xf32>
    %54 = tpu.matmul %52, %53, %cst_22 {dimension_numbers = #tpu.dot_dimension_numbers<[1], [1], [0], [0], [0, 0, 1, 0], [], []>} : vector<8x8xf32>, vector<8x8xf32>, vector<8x8xf32> -> vector<8x8xf32>
    %cst_23 = arith.constant dense<0xFF800000> : vector<8xf32>
    %55 = vector.multi_reduction <maximumf>, %54, %cst_23 [1] : vector<8x8xf32> to vector<8xf32>
    %56 = vector.shape_cast %55 : vector<8xf32> to vector<8x1xf32>
    %57 = vector.broadcast %56 : vector<8x1xf32> to vector<8x8xf32>
    %58 = arith.subf %54, %57 : vector<8x8xf32>
    %59 = math.exp %58 : vector<8x8xf32>
    %cst_24 = arith.constant dense<0.000000e+00> : vector<8xf32>
    %60 = vector.multi_reduction <add>, %59, %cst_24 [1] : vector<8x8xf32> to vector<8xf32>
    %61 = vector.shape_cast %60 : vector<8xf32> to vector<8x1xf32>
    %cst_25 = arith.constant dense<0.000000e+00> : vector<8x8xf32>
    %62 = tpu.matmul %59, %53, %cst_25 {dimension_numbers = #tpu.dot_dimension_numbers<[1], [0], [0], [1], [0, 0, 1, 1], [], []>} : vector<8x8xf32>, vector<8x8xf32>, vector<8x8xf32> -> vector<8x8xf32>
    %63 = tpu.reciprocal %61 : vector<8x1xf32> -> vector<8x1xf32>
    %64 = vector.broadcast %63 : vector<8x1xf32> to vector<8x8xf32>
    %65 = arith.mulf %62, %64 : vector<8x8xf32>
    %c0_26 = arith.constant 0 : index
    %c24 = arith.constant 24 : index
    %66 = vector.load %arg7[%c0_26, %c24] : memref<8x32xf32, #tpu.memory_space<vmem>>, vector<8x8xf32>
    tpu.vector_store %arg7[%c0_26, %c24], %65 {strides = array<i32>} : memref<8x32xf32, #tpu.memory_space<vmem>>, vector<8x8xf32>,
    %c0_27 = arith.constant 0 : index
    %c0_28 = arith.constant 0 : index
    %67 = vector.load %arg7[%c0_27, %c0_28] : memref<8x32xf32, #tpu.memory_space<vmem>>, vector<8x32xf32>
    %c0_29 = arith.constant 0 : index
    %c0_30 = arith.constant 0 : index
    %68 = vector.load %arg4[%c0_29, %c0_30] : memref<32x32xf32, #tpu.memory_space<vmem>>, vector<32x32xf32>
    %cst_31 = arith.constant dense<0.000000e+00> : vector<8x32xf32>
    %69 = tpu.matmul %67, %68, %cst_31 {dimension_numbers = #tpu.dot_dimension_numbers<[1], [0], [0], [1], [0, 0, 1, 1], [], []>} : vector<8x32xf32>, vector<32x32xf32>, vector<8x32xf32> -> vector<8x32xf32>
    %c0_32 = arith.constant 0 : index
    %c0_33 = arith.constant 0 : index
    %70 = vector.load %arg5[%c0_32, %c0_33] : memref<1x32xf32, #tpu.memory_space<vmem>>, vector<1x32xf32>
    %71 = vector.broadcast %70 : vector<1x32xf32> to vector<8x32xf32>
    %72 = arith.addf %69, %71 : vector<8x32xf32>
    %c0_34 = arith.constant 0 : index
    %c0_35 = arith.constant 0 : index
    %c0_36 = arith.constant 0 : index
    %73 = vector.load %arg6[%c0_34, %c0_35, %c0_36] : memref<1x8x32xf32, #tpu.memory_space<vmem>>, vector<1x8x32xf32>
    %74 = vector.shape_cast %73 : vector<1x8x32xf32> to vector<8x32xf32>
    %75 = vector.shape_cast %72 : vector<8x32xf32> to vector<1x8x32xf32>
    tpu.vector_store %arg6[%c0_34, %c0_35, %c0_36], %75 {strides = array<i32>} : memref<1x8x32xf32, #tpu.memory_space<vmem>>, vector<1x8x32xf32>,
    return
  }
  func.func @transform_0(%arg0: i32) -> (i32, i32, i32) {
    %c0_i32 = arith.constant 0 : i32
    %c0_i32_0 = arith.constant 0 : i32
    %c0_i32_1 = arith.constant 0 : i32
    return %arg0, %c0_i32, %c0_i32_0 : i32, i32, i32
  }
  func.func @transform_1(%arg0: i32) -> (i32, i32) {
    %c0_i32 = arith.constant 0 : i32
    %c0_i32_0 = arith.constant 0 : i32
    %c0_i32_1 = arith.constant 0 : i32
    return %c0_i32, %c0_i32_0 : i32, i32
  }
  func.func @transform_2(%arg0: i32) -> (i32, i32) {
    %c0_i32 = arith.constant 0 : i32
    %c0_i32_0 = arith.constant 0 : i32
    %c0_i32_1 = arith.constant 0 : i32
    return %c0_i32, %c0_i32_0 : i32, i32
  }
  func.func @transform_3(%arg0: i32) -> (i32, i32) {
    %c0_i32 = arith.constant 0 : i32
    %c0_i32_0 = arith.constant 0 : i32
    %c0_i32_1 = arith.constant 0 : i32
    return %c0_i32, %c0_i32_0 : i32, i32
  }
  func.func @transform_4(%arg0: i32) -> (i32, i32) {
    %c0_i32 = arith.constant 0 : i32
    %c0_i32_0 = arith.constant 0 : i32
    %c0_i32_1 = arith.constant 0 : i32
    return %c0_i32, %c0_i32_0 : i32, i32
  }
  func.func @transform_5(%arg0: i32) -> (i32, i32, i32) {
    %c0_i32 = arith.constant 0 : i32
    %c0_i32_0 = arith.constant 0 : i32
    %c0_i32_1 = arith.constant 0 : i32
    return %arg0, %c0_i32, %c0_i32_0 : i32, i32, i32
  }
}

</mosaic_0001>

<llo_original>
// kernel: multi_head_self_attention.1
$region0: #{multi_head_self_attention.1}
  #allocation0 [shape = 'u32[]', space=smem, size = 0x4, offset = 0x4, fixed_abs, tag = 'smem constant byte address 0x4 - core index']
  #allocation1 [shape = 'u32[144,128]{1,0:T(1,128)}', space=vmem, size = 0x12000, scoped, tag = 'internal scratch']
  #allocation2 [shape = 'f32[8,32]{1,0:T(8,128)}', space=vmem, size = 0x1000, scoped, tag = 'scratch operand']
  %s0 = inlined_call_operand.hbm [shape: f32[2,8,32], index: 0, kind: input, shape index: {}]
  %s1 = inlined_call_operand.hbm [shape: f32[32,64], index: 1, kind: input, shape index: {}]
  %s2 = inlined_call_operand.vmem [shape: f32[1,64], index: 2, kind: input, shape index: {}]
  %s3 = inlined_call_operand.hbm [shape: f32[32,32], index: 3, kind: input, shape index: {}]
  %s4 = inlined_call_operand.vmem [shape: f32[1,32], index: 4, kind: input, shape index: {}]
  %s5 = inlined_call_operand.hbm [shape: f32[2,8,32], index: 5, kind: output, shape index: {}]
  %s6 = sld [smem:[#allocation0]]
  $region65: #{multi_head_self_attention.1} parent=0
    _
  %s8 = ssub.s32 1, %s6
  %s9 = scalar_select 0, %s8, %s6
  $region1: #{multi_head_self_attention.1} parent=0
    #allocation3 [shape = 'u8[8192]{0}', space=vmem, size = 0x2000, scoped, tag = 'input window, operand 0']
    #allocation4 [shape = 's32[2]{0}', space=sflag, size = 0x8, scoped, tag = 'scoped memory for multi_head_self_attention.1']
    #allocation5 [shape = 's32[2]{0}', space=sflag, size = 0x8, scoped, tag = 'scoped memory for multi_head_self_attention.1']
    #allocation6 [shape = 'u8[16384]{0}', space=vmem, size = 0x4000, scoped, tag = 'input window, operand 1, single buffered']
    #allocation7 [shape = 's32[1]{0}', space=sflag, size = 0x4, scoped, tag = 'scoped memory for multi_head_self_attention.1']
    #allocation8 [shape = 'u8[16384]{0}', space=vmem, size = 0x4000, scoped, tag = 'input window, operand 3, single buffered']
    #allocation9 [shape = 'u8[8192]{0}', space=vmem, size = 0x2000, scoped, tag = 'output window, operand 0']
    %10 = vsyncpa [#allocation4], 0
    %s11 = scalar_lea.sflag [#allocation4], 1
    %12 = vsyncpa %s11, 0
    %13 = vsyncpa [#allocation7], 0
    %14 = vsyncpa [#allocation5], 0
    %s15 = scalar_lea.sflag [#allocation5], 1
    %16 = vsyncpa %s15, 0
    loop: start=0, step=1, limit=4
    $region2: #{multi_head_self_attention.1} parent=1 // loop_pre_header
      _
    $region3: #{multi_head_self_attention.1} parent=1 // loop_header
      %s18 = sphi 0, %s22
      %p19 = scmp.ge.s32.totalorder %s18, 4
      %s28 = sphi 0, %s30
      %s31 = sphi 0, %s28
      %s32 = sphi 0, %s31
      %s48 = sphi 0, %s32
      %s52 = sphi 0, %s52
      %s54 = sphi 0, %s52
      %s55 = sphi 0, %s54
      %s69 = sphi 0, %s55
      %s73 = sphi 0, %s73
      %s75 = sphi 0, %s73
      %s76 = sphi 0, %s75
      %s90 = sphi 0, %s76
      %s94 = sphi 0, %s94
      %s96 = sphi 0, %s94
      %s97 = sphi 0, %s96
      %s111 = sphi 0, %s97
      %s115 = sphi 0, %s115
      %s117 = sphi 0, %s115
      %s118 = sphi 0, %s117
      %s132 = sphi 0, %s118
      %s138 = sphi 0, %s140
      %s141 = sphi 0, %s138
      %s142 = sphi 0, %s141
      %s158 = sphi 0, %s142
    $region4: #{multi_head_self_attention.1} parent=1 // loop_header_branch
      %21 = sbr.rel (%p19) target = $region8
    $region5: #{multi_head_self_attention.1} parent=1 // loop_body
      %s23 = ssub.s32 %s18, 1
      %s24 = ssub.s32 %s18, 2
      %s25 = sadd.s32 %s18, 1
      %s26 = ssub.s32 %s18, %s25
      %p27 = scmp.eq.s32.totalorder %s26, 0
      %s29 = sadd.s32 %s28, 1
      %s30 = scalar_select %p27, %s28, %s29
      %p33 = pneg %p27
      %p34 = scmp.eq.s32.totalorder %s18, 1
      %p35 = por %p33, %p34
      %p36 = scmp.ne.s32.totalorder %s28, %s31
      %p37 = scmp.eq.s32.totalorder %s18, 0
      %p38 = por %p36, %p37
      %p39 = scmp.ne.s32.totalorder %s28, %s31
      %p40 = scmp.eq.s32.totalorder %s23, 1
      %p41 = por %p39, %p40
      %p42 = scmp.ne.s32.totalorder %s31, %s32
      %p43 = scmp.eq.s32.totalorder %s23, 0
      %p44 = por %p42, %p43
      %p45 = scmp.ne.s32.totalorder %s31, %s32
      %p46 = scmp.eq.s32.totalorder %s24, 1
      %p47 = por %p45, %p46
      %p49 = scmp.ne.s32.totalorder %s32, %s48
      %p50 = scmp.eq.s32.totalorder %s24, 0
      %p51 = por %p49, %p50
      %s53 = sadd.s32 %s52, 1
      %p56 = scmp.eq.s32.totalorder %s18, 1
      %p57 = scmp.ne.s32.totalorder %s52, %s54
      %p58 = scmp.eq.s32.totalorder %s18, 0
      %p59 = por %p57, %p58
      %p60 = scmp.ne.s32.totalorder %s52, %s54
      %p61 = scmp.eq.s32.totalorder %s23, 1
      %p62 = por %p60, %p61
      %p63 = scmp.ne.s32.totalorder %s54, %s55
      %p64 = scmp.eq.s32.totalorder %s23, 0
      %p65 = por %p63, %p64
      %p66 = scmp.ne.s32.totalorder %s54, %s55
      %p67 = scmp.eq.s32.totalorder %s24, 1
      %p68 = por %p66, %p67
      %p70 = scmp.ne.s32.totalorder %s55, %s69
      %p71 = scmp.eq.s32.totalorder %s24, 0
      %p72 = por %p70, %p71
      %s74 = sadd.s32 %s73, 1
      %p77 = scmp.eq.s32.totalorder %s18, 1
      %p78 = scmp.ne.s32.totalorder %s73, %s75
      %p79 = scmp.eq.s32.totalorder %s18, 0
      %p80 = por %p78, %p79
      %p81 = scmp.ne.s32.totalorder %s73, %s75
      %p82 = scmp.eq.s32.totalorder %s23, 1
      %p83 = por %p81, %p82
      %p84 = scmp.ne.s32.totalorder %s75, %s76
      %p85 = scmp.eq.s32.totalorder %s23, 0
      %p86 = por %p84, %p85
      %p87 = scmp.ne.s32.totalorder %s75, %s76
      %p88 = scmp.eq.s32.totalorder %s24, 1
      %p89 = por %p87, %p88
      %p91 = scmp.ne.s32.totalorder %s76, %s90
      %p92 = scmp.eq.s32.totalorder %s24, 0
      %p93 = por %p91, %p92
      %s95 = sadd.s32 %s94, 1
      %p98 = scmp.eq.s32.totalorder %s18, 1
      %p99 = scmp.ne.s32.totalorder %s94, %s96
      %p100 = scmp.eq.s32.totalorder %s18, 0
      %p101 = por %p99, %p100
      %p102 = scmp.ne.s32.totalorder %s94, %s96
      %p103 = scmp.eq.s32.totalorder %s23, 1
      %p104 = por %p102, %p103
      %p105 = scmp.ne.s32.totalorder %s96, %s97
      %p106 = scmp.eq.s32.totalorder %s23, 0
      %p107 = por %p105, %p106
      %p108 = scmp.ne.s32.totalorder %s96, %s97
      %p109 = scmp.eq.s32.totalorder %s24, 1
      %p110 = por %p108, %p109
      %p112 = scmp.ne.s32.totalorder %s97, %s111
      %p113 = scmp.eq.s32.totalorder %s24, 0
      %p114 = por %p112, %p113
      %s116 = sadd.s32 %s115, 1
      %p119 = scmp.eq.s32.totalorder %s18, 1
      %p120 = scmp.ne.s32.totalorder %s115, %s117
      %p121 = scmp.eq.s32.totalorder %s18, 0
      %p122 = por %p120, %p121
      %p123 = scmp.ne.s32.totalorder %s115, %s117
      %p124 = scmp.eq.s32.totalorder %s23, 1
      %p125 = por %p123, %p124
      %p126 = scmp.ne.s32.totalorder %s117, %s118
      %p127 = scmp.eq.s32.totalorder %s23, 0
      %p128 = por %p126, %p127
      %p129 = scmp.ne.s32.totalorder %s117, %s118
      %p130 = scmp.eq.s32.totalorder %s24, 1
      %p131 = por %p129, %p130
      %p133 = scmp.ne.s32.totalorder %s118, %s132
      %p134 = scmp.eq.s32.totalorder %s24, 0
      %p135 = por %p133, %p134
      %s136 = ssub.s32 %s18, %s25
      %p137 = scmp.eq.s32.totalorder %s136, 0
      %s139 = sadd.s32 %s138, 1
      %s140 = scalar_select %p137, %s138, %s139
      %p143 = pneg %p137
      %p144 = scmp.eq.s32.totalorder %s18, 1
      %p145 = por %p143, %p144
      %p146 = scmp.ne.s32.totalorder %s138, %s141
      %p147 = scmp.eq.s32.totalorder %s18, 0
      %p148 = por %p146, %p147
      %p149 = scmp.ne.s32.totalorder %s138, %s141
      %p150 = scmp.eq.s32.totalorder %s23, 1
      %p151 = por %p149, %p150
      %p152 = scmp.ne.s32.totalorder %s141, %s142
      %p153 = scmp.eq.s32.totalorder %s23, 0
      %p154 = por %p152, %p153
      %p155 = scmp.ne.s32.totalorder %s141, %s142
      %p156 = scmp.eq.s32.totalorder %s24, 1
      %p157 = por %p155, %p156
      %p159 = scmp.ne.s32.totalorder %s142, %s158
      %p160 = scmp.eq.s32.totalorder %s24, 0
      %p161 = por %p159, %p160
      %p162 = scmp.le.s32.totalorder 1, %s18
      %p163 = scmp.lt.s32.totalorder %s18, 3
      %p164 = pnand %p162, %p163
      %p165 = pneg %p164
      // Predicated region
      $region9: #{multi_head_self_attention.1} parent=5 // pred_check
        _
      $region10: #{multi_head_self_attention.1} parent=5 // pred_check_branch
        %167 = sbr.rel (%p164) target = $region12
      $region11: #{multi_head_self_attention.1} parent=5 // pred_region
        %s168 = ssub.s32 %s18, 1
        // Predicated region
        $region13: #{multi_head_self_attention.1} parent=11 // pred_check
          %p169 = pneg %p65
        $region14: #{multi_head_self_attention.1} parent=11 // pred_check_branch
          %171 = sbr.rel (%p169) target = $region16
        $region15: #{multi_head_self_attention.1} parent=11 // pred_region
          %s173 = ssub.s32 512, 512
          %174 = vsyncadd [#allocation7], %s173
          %s175 = sshll.u32 [#allocation6], 4
          %s176 = int_to_ptr.vmem [resolvable:$true] %s175
          %181 = dma.hbm_to_vmem [thread:$0]  %s1, 512, %s176, [#allocation7], 128, 128, 8
        $region16: #{multi_head_self_attention.1} parent=11 // pred_fallthru
          _
        // Predicated region
        $region17: #{multi_head_self_attention.1} parent=11 // pred_check
          %p182 = pneg %p86
        $region18: #{multi_head_self_attention.1} parent=11 // pred_check_branch
          %184 = sbr.rel (%p182) target = $region20
        $region19: #{multi_head_self_attention.1} parent=11 // pred_region
          _
        $region20: #{multi_head_self_attention.1} parent=11 // pred_fallthru
          _
        // Predicated region
        $region21: #{multi_head_self_attention.1} parent=11 // pred_check
          %p185 = pneg %p107
        $region22: #{multi_head_self_attention.1} parent=11 // pred_check_branch
          %187 = sbr.rel (%p185) target = $region24
        $region23: #{multi_head_self_attention.1} parent=11 // pred_region
          %s189 = ssub.s32 512, 512
          %190 = vsyncadd [#allocation7], %s189
          %s191 = sshll.u32 [#allocation8], 4
          %s192 = int_to_ptr.vmem [resolvable:$true] %s191
          %197 = dma.hbm_to_vmem [thread:$0]  %s3, 512, %s192, [#allocation7], 128, 128, 8
        $region24: #{multi_head_self_attention.1} parent=11 // pred_fallthru
          _
        // Predicated region
        $region25: #{multi_head_self_attention.1} parent=11 // pred_check
          %p198 = pneg %p128
        $region26: #{multi_head_self_attention.1} parent=11 // pred_check_branch
          %200 = sbr.rel (%p198) target = $region28
        $region27: #{multi_head_self_attention.1} parent=11 // pred_region
          _
        $region28: #{multi_head_self_attention.1} parent=11 // pred_fallthru
          _
      $region12: #{multi_head_self_attention.1} parent=5 // pred_fallthru
        _
      %p201 = scmp.lt.s32.totalorder %s18, 2
      // Predicated region
      $region29: #{multi_head_self_attention.1} parent=5 // pred_check
        %p202 = pneg %p201
      $region30: #{multi_head_self_attention.1} parent=5 // pred_check_branch
        %204 = sbr.rel (%p202) target = $region32
      $region31: #{multi_head_self_attention.1} parent=5 // pred_region
        // Predicated region
        $region33: #{multi_head_self_attention.1} parent=31 // pred_check
          %p205 = pneg %p38
        $region34: #{multi_head_self_attention.1} parent=31 // pred_check_branch
          %207 = sbr.rel (%p205) target = $region36
        $region35: #{multi_head_self_attention.1} parent=31 // pred_region
          %s208 = sand.u32 %s28, 1
          %s209 = scalar_lea.sflag [#allocation4], %s208
          %s210 = sand.u32 %s28, 1
          %s211 = smul.addr %s210, 8
          %s212 = scalar_lea.vmem [#allocation3], %s211
          %s214 = ssub.s32 128, 128
          %215 = vsyncadd %s209, %s214
          %s216 = smul.addr %s18, 128
          %s217 = scalar_lea.hbm %s0, %s216
          %s219 = sshll.u32 %s212, 4
          %s220 = int_to_ptr.vmem [resolvable:$true] %s219
          %222 = dma.hbm_to_vmem [thread:$0]  %s217, 128, %s220, %s209
        $region36: #{multi_head_self_attention.1} parent=31 // pred_fallthru
          _
      $region32: #{multi_head_self_attention.1} parent=5 // pred_fallthru
        _
      %p223 = scmp.le.s32.totalorder 1, %s18
      %p224 = scmp.lt.s32.totalorder %s18, 3
      %p225 = pnand %p223, %p224
      %p226 = pneg %p225
      // Predicated region
      $region37: #{multi_head_self_attention.1} parent=5 // pred_check
        _
      $region38: #{multi_head_self_attention.1} parent=5 // pred_check_branch
        %228 = sbr.rel (%p225) target = $region40
      $region39: #{multi_head_self_attention.1} parent=5 // pred_region
        %s229 = ssub.s32 %s18, 1
        %s230 = sand.u32 %s31, 1
        %s231 = scalar_lea.sflag [#allocation4], %s230
        %s232 = sand.u32 %s31, 1
        %s233 = smul.addr %s232, 8
        %s234 = scalar_lea.vmem [#allocation3], %s233
        // Predicated region
        $region41: #{multi_head_self_attention.1} parent=39 // pred_check
          %p235 = pneg %p44
        $region42: #{multi_head_self_attention.1} parent=39 // pred_check_branch
          %237 = sbr.rel (%p235) target = $region44
        $region43: #{multi_head_self_attention.1} parent=39 // pred_region
          %238 = dma.done %s231, 128
        $region44: #{multi_head_self_attention.1} parent=39 // pred_fallthru
          _
        // Predicated region
        $region45: #{multi_head_self_attention.1} parent=39 // pred_check
          %p239 = pneg %p65
        $region46: #{multi_head_self_attention.1} parent=39 // pred_check_branch
          %241 = sbr.rel (%p239) target = $region48
        $region47: #{multi_head_self_attention.1} parent=39 // pred_region
          %242 = dma.done [#allocation7], 512
        $region48: #{multi_head_self_attention.1} parent=39 // pred_fallthru
          _
        // Predicated region
        $region49: #{multi_head_self_attention.1} parent=39 // pred_check
          %p243 = pneg %p107
        $region50: #{multi_head_self_attention.1} parent=39 // pred_check_branch
          %245 = sbr.rel (%p243) target = $region52
        $region51: #{multi_head_self_attention.1} parent=39 // pred_region
          %246 = dma.done [#allocation7], 512
        $region52: #{multi_head_self_attention.1} parent=39 // pred_fallthru
          _
        %s247 = sand.u32 %s31, 1
        %s248 = scalar_lea.sflag [#allocation4], %s247
        %s249 = sand.u32 %s31, 1
        %s250 = smul.addr %s249, 8
        %s251 = scalar_lea.vmem [#allocation3], %s250
        %p252 = pneg %p44
        %p253 = pneg %p41
        %p254 = pneg %p65
        %p255 = pneg %p62
        %p256 = pneg %p86
        %p257 = pneg %p83
        %p258 = pneg %p107
        %p259 = pneg %p104
        %p260 = pneg %p128
        %p261 = pneg %p125
        %p262 = pneg %p154
        %p263 = pneg %p151
        %s264 = sand.u32 %s141, 1
        %s265 = scalar_lea.sflag [#allocation5], %s264
        %s266 = sand.u32 %s141, 1
        %s267 = smul.addr %s266, 8
        %s268 = scalar_lea.vmem [#allocation9], %s267
        %v269 = vld [vmem:[%s234] sm:$0xff]
        %v270 = vld [vmem:[#allocation6] sm:$0xff]
        %v271 = vld [vmem:[#allocation6 + $0x8] sm:$0xff]
        %v272 = vld [vmem:[#allocation6 + $0x10] sm:$0xff]
        %v273 = vld [vmem:[#allocation6 + $0x18] sm:$0xff]
        %v274 = vld [vmem:[%s2] sm:$0x1]
        %v276 = vlaneseq
        %v277 = vshrl.u32 %v276, 7
        %v278 = vsub.s32 0, %v277
        %v279 = vrot.slane %v274, %v278
        %vm281 = vcmask 261120
        %v283 = vsel %vm281, %v269, 0
        %285 = vmatprep.subr.mxu0 0.0
        %286 = vmatpush1.msra.mxu0 %v270
        %287 = vmatprep.subr.mxu0 0.0
        %288 = vmatpush1.msra.mxu0 %v271
        %289 = vmatprep.subr.mxu0 0.0
        %290 = vmatpush1.msra.mxu0 %v272
        %291 = vmatprep.subr.mxu0 0.0
        %292 = vmatpush1.msra.mxu0 %v273
        %293 = vmatprep.subr.mxu0 0.0
        %294 = vmatpush1.msra.mxu0 0.0
        %295 = vmatprep.subr.mxu0 0.0
        %296 = vmatpush1.msra.mxu0 0.0
        %297 = vmatprep.subr.mxu0 0.0
        %298 = vmatpush1.msra.mxu0 0.0
        %299 = vmatprep.subr.mxu0 0.0
        %300 = vmatpush1.msra.mxu0 0.0
        %301 = vmatprep.subr.mxu0 0.0
        %302 = vmatpush1.msra.mxu0 0.0
        %303 = vmatprep.subr.mxu0 0.0
        %304 = vmatpush1.msra.mxu0 0.0
        %305 = vmatprep.subr.mxu0 0.0
        %306 = vmatpush1.msra.mxu0 0.0
        %307 = vmatprep.subr.mxu0 0.0
        %308 = vmatpush1.msra.mxu0 0.0
        %309 = vmatprep.subr.mxu0 0.0
        %310 = vmatpush1.msra.mxu0 0.0
        %311 = vmatprep.subr.mxu0 0.0
        %312 = vmatpush1.msra.mxu0 0.0
        %313 = vmatprep.subr.mxu0 0.0
        %314 = vmatpush1.msra.mxu0 0.0
        %315 = vmatprep.subr.mxu0 0.0
        %316 = vmatpush1.msra.mxu0 0.0
        %317 = vmatprep.subr.mxu0 0.0
        %318 = vmatpush1.msra.mxu0 0.0
        %319 = vmatprep.subr.mxu0 0.0
        %320 = vmatpush1.msra.mxu0 0.0
        %321 = vmatprep.subr.mxu0 0.0
        %322 = vmatpush1.msra.mxu0 0.0
        %323 = vmatprep.subr.mxu0 0.0
        %324 = vmatpush1.msra.mxu0 0.0
        %325 = vmatprep.subr.mxu0 0.0
        %326 = vmatpush1.msra.mxu0 0.0
        %327 = vmatprep.subr.mxu0 0.0
        %328 = vmatpush1.msra.mxu0 0.0
        %329 = vmatprep.subr.mxu0 0.0
        %330 = vmatpush1.msra.mxu0 0.0
        %331 = vmatprep.subr.mxu0 0.0
        %332 = vmatpush1.msra.mxu0 0.0
        %333 = vmatprep.subr.mxu0 0.0
        %334 = vmatpush1.msra.mxu0 0.0
        %335 = vmatprep.subr.mxu0 0.0
        %336 = vmatpush1.msra.mxu0 0.0
        %337 = vmatprep.subr.mxu0 0.0
        %338 = vmatpush1.msra.mxu0 0.0
        %339 = vmatprep.subr.mxu0 0.0
        %340 = vmatpush1.msra.mxu0 0.0
        %341 = vmatprep.subr.mxu0 0.0
        %342 = vmatpush1.msra.mxu0 0.0
        %343 = vmatprep.subr.mxu0 0.0
        %344 = vmatpush1.msra.mxu0 0.0
        %345 = vmatprep.subr.mxu0 0.0
        %346 = vmatpush1.msra.mxu0 0.0
        %347 = vmatprep.subr.mxu0 0.0
        %348 = vmatpush1.msra.mxu0 0.0
        %349 = vmatprep.mubr.f32.mxu0 0.0
        %350 = vmatmul.mubr.f32.gmra.mrb[0].mxu0 %v283
        %v351 = vpop.f32.mrb[0].mxu0
        %v352 = vadd.f32 %v279, %v351
        %v353 = vpop.f32.mrb[0].mxu0
        %354 = vdwg.mxu0
        %356 = vrot.lane.b32.xlu0 %v352, 96
        %v357 = vpop.permute.xlu0 %356
        %vm358 = vcmask 64512
        %v359 = vsel %vm358, %v352, 0
        %v361 = vsel %vm358, %v357, 0
        %363 = vmatprep.subr.mxu0 0.0
        %364 = vmatpush1.xpose.msra.mxu0 %v361
        %365 = vmatprep.subr.mxu0 0.0
        %366 = vmatpush1.xpose.msra.mxu0 0.0
        %367 = vmatprep.subr.mxu0 0.0
        %368 = vmatpush1.xpose.msra.mxu0 0.0
        %369 = vmatprep.subr.mxu0 0.0
        %370 = vmatpush1.xpose.msra.mxu0 0.0
        %371 = vmatprep.subr.mxu0 0.0
        %372 = vmatpush1.xpose.msra.mxu0 0.0
        %373 = vmatprep.subr.mxu0 0.0
        %374 = vmatpush1.xpose.msra.mxu0 0.0
        %375 = vmatprep.subr.mxu0 0.0
        %376 = vmatpush1.xpose.msra.mxu0 0.0
        %377 = vmatprep.subr.mxu0 0.0
        %378 = vmatpush1.xpose.msra.mxu0 0.0
        %379 = vmatprep.subr.mxu0 0.0
        %380 = vmatpush1.xpose.msra.mxu0 0.0
        %381 = vmatprep.subr.mxu0 0.0
        %382 = vmatpush1.xpose.msra.mxu0 0.0
        %383 = vmatprep.subr.mxu0 0.0
        %384 = vmatpush1.xpose.msra.mxu0 0.0
        %385 = vmatprep.subr.mxu0 0.0
        %386 = vmatpush1.xpose.msra.mxu0 0.0
        %387 = vmatprep.subr.mxu0 0.0
        %388 = vmatpush1.xpose.msra.mxu0 0.0
        %389 = vmatprep.subr.mxu0 0.0
        %390 = vmatpush1.xpose.msra.mxu0 0.0
        %391 = vmatprep.subr.mxu0 0.0
        %392 = vmatpush1.xpose.msra.mxu0 0.0
        %393 = vmatprep.subr.mxu0 0.0
        %394 = vmatpush1.xpose.msra.mxu0 0.0
        %395 = vmatprep.subr.mxu0 0.0
        %396 = vmatpush1.xpose.msra.mxu0 0.0
        %397 = vmatprep.subr.mxu0 0.0
        %398 = vmatpush1.xpose.msra.mxu0 0.0
        %399 = vmatprep.subr.mxu0 0.0
        %400 = vmatpush1.xpose.msra.mxu0 0.0
        %401 = vmatprep.subr.mxu0 0.0
        %402 = vmatpush1.xpose.msra.mxu0 0.0
        %403 = vmatprep.subr.mxu0 0.0
        %404 = vmatpush1.xpose.msra.mxu0 0.0
        %405 = vmatprep.subr.mxu0 0.0
        %406 = vmatpush1.xpose.msra.mxu0 0.0
        %407 = vmatprep.subr.mxu0 0.0
        %408 = vmatpush1.xpose.msra.mxu0 0.0
        %409 = vmatprep.subr.mxu0 0.0
        %410 = vmatpush1.xpose.msra.mxu0 0.0
        %411 = vmatprep.subr.mxu0 0.0
        %412 = vmatpush1.xpose.msra.mxu0 0.0
        %413 = vmatprep.subr.mxu0 0.0
        %414 = vmatpush1.xpose.msra.mxu0 0.0
        %415 = vmatprep.subr.mxu0 0.0
        %416 = vmatpush1.xpose.msra.mxu0 0.0
        %417 = vmatprep.subr.mxu0 0.0
        %418 = vmatpush1.xpose.msra.mxu0 0.0
        %419 = vmatprep.subr.mxu0 0.0
        %420 = vmatpush1.xpose.msra.mxu0 0.0
        %421 = vmatprep.subr.mxu0 0.0
        %422 = vmatpush1.xpose.msra.mxu0 0.0
        %423 = vmatprep.subr.mxu0 0.0
        %424 = vmatpush1.xpose.msra.mxu0 0.0
        %425 = vmatprep.subr.mxu0 0.0
        %426 = vmatpush1.xpose.msra.mxu0 0.0
        %427 = vmatprep.mubr.f32.mxu0 0.0
        %428 = vmatmul.mubr.f32.gmra.mrb[0].mxu0 %v359
        %v429 = vpop.f32.mrb[0].mxu0
        %v430 = vadd.f32 0.0, %v429
        %v431 = vpop.f32.mrb[0].mxu0
        %432 = vdwg.mxu0
        %v433 = vsel %vm358, %v430, -inf
        %434 = vmax.xlane.f32.xlu0 %v433
        %v435 = vpop.xlane.xlu0 %434
        %v436 = vsub.f32 %v430, %v435
        %v437 = vmul.f32 %v436, 1.442695
        %v438 = vpow.pop %v437
        %v439 = vsel %vm358, %v438, 0.0
        %440 = vadd.xlane.f32.xlu0 %v439
        %v441 = vpop.xlane.xlu0 %440
        %v444 = vsel %vm358, %v438, 0
        %446 = vmatprep.subr.mxu0 0.0
        %447 = vmatpush1.msra.mxu0 %v357
        %448 = vmatprep.subr.mxu0 0.0
        %449 = vmatpush1.msra.mxu0 0.0
        %450 = vmatprep.subr.mxu0 0.0
        %451 = vmatpush1.msra.mxu0 0.0
        %452 = vmatprep.subr.mxu0 0.0
        %453 = vmatpush1.msra.mxu0 0.0
        %454 = vmatprep.subr.mxu0 0.0
        %455 = vmatpush1.msra.mxu0 0.0
        %456 = vmatprep.subr.mxu0 0.0
        %457 = vmatpush1.msra.mxu0 0.0
        %458 = vmatprep.subr.mxu0 0.0
        %459 = vmatpush1.msra.mxu0 0.0
        %460 = vmatprep.subr.mxu0 0.0
        %461 = vmatpush1.msra.mxu0 0.0
        %462 = vmatprep.subr.mxu0 0.0
        %463 = vmatpush1.msra.mxu0 0.0
        %464 = vmatprep.subr.mxu0 0.0
        %465 = vmatpush1.msra.mxu0 0.0
        %466 = vmatprep.subr.mxu0 0.0
        %467 = vmatpush1.msra.mxu0 0.0
        %468 = vmatprep.subr.mxu0 0.0
        %469 = vmatpush1.msra.mxu0 0.0
        %470 = vmatprep.subr.mxu0 0.0
        %471 = vmatpush1.msra.mxu0 0.0
        %472 = vmatprep.subr.mxu0 0.0
        %473 = vmatpush1.msra.mxu0 0.0
        %474 = vmatprep.subr.mxu0 0.0
        %475 = vmatpush1.msra.mxu0 0.0
        %476 = vmatprep.subr.mxu0 0.0
        %477 = vmatpush1.msra.mxu0 0.0
        %478 = vmatprep.subr.mxu0 0.0
        %479 = vmatpush1.msra.mxu0 0.0
        %480 = vmatprep.subr.mxu0 0.0
        %481 = vmatpush1.msra.mxu0 0.0
        %482 = vmatprep.subr.mxu0 0.0
        %483 = vmatpush1.msra.mxu0 0.0
        %484 = vmatprep.subr.mxu0 0.0
        %485 = vmatpush1.msra.mxu0 0.0
        %486 = vmatprep.subr.mxu0 0.0
        %487 = vmatpush1.msra.mxu0 0.0
        %488 = vmatprep.subr.mxu0 0.0
        %489 = vmatpush1.msra.mxu0 0.0
        %490 = vmatprep.subr.mxu0 0.0
        %491 = vmatpush1.msra.mxu0 0.0
        %492 = vmatprep.subr.mxu0 0.0
        %493 = vmatpush1.msra.mxu0 0.0
        %494 = vmatprep.subr.mxu0 0.0
        %495 = vmatpush1.msra.mxu0 0.0
        %496 = vmatprep.subr.mxu0 0.0
        %497 = vmatpush1.msra.mxu0 0.0
        %498 = vmatprep.subr.mxu0 0.0
        %499 = vmatpush1.msra.mxu0 0.0
        %500 = vmatprep.subr.mxu0 0.0
        %501 = vmatpush1.msra.mxu0 0.0
        %502 = vmatprep.subr.mxu0 0.0
        %503 = vmatpush1.msra.mxu0 0.0
        %504 = vmatprep.subr.mxu0 0.0
        %505 = vmatpush1.msra.mxu0 0.0
        %506 = vmatprep.subr.mxu0 0.0
        %507 = vmatpush1.msra.mxu0 0.0
        %508 = vmatprep.subr.mxu0 0.0
        %509 = vmatpush1.msra.mxu0 0.0
        %510 = vmatprep.mubr.f32.mxu0 0.0
        %511 = vmatmul.mubr.f32.gmra.mrb[0].mxu0 %v444
        %v512 = vpop.f32.mrb[0].mxu0
        %v513 = vadd.f32 0.0, %v512
        %v514 = vpop.f32.mrb[0].mxu0
        %515 = vdwg.mxu0
        %v516 = vrcp.pop %v441
        %v517 = vmul.f32 %v513, %v516
        %518 = vst.msk [vmem:[#allocation2] sm:$0xff] %vm358, %v517
        %519 = vrot.lane.b32.xlu0 %v352, 120
        %v520 = vpop.permute.xlu0 %519
        %521 = vrot.lane.b32.xlu0 %v352, 88
        %v522 = vpop.permute.xlu0 %521
        %v523 = vsel %vm358, %v520, 0
        %v525 = vsel %vm358, %v522, 0
        %527 = vmatprep.subr.mxu0 0.0
        %528 = vmatpush1.xpose.msra.mxu0 %v525
        %529 = vmatprep.subr.mxu0 0.0
        %530 = vmatpush1.xpose.msra.mxu0 0.0
        %531 = vmatprep.subr.mxu0 0.0
        %532 = vmatpush1.xpose.msra.mxu0 0.0
        %533 = vmatprep.subr.mxu0 0.0
        %534 = vmatpush1.xpose.msra.mxu0 0.0
        %535 = vmatprep.subr.mxu0 0.0
        %536 = vmatpush1.xpose.msra.mxu0 0.0
        %537 = vmatprep.subr.mxu0 0.0
        %538 = vmatpush1.xpose.msra.mxu0 0.0
        %539 = vmatprep.subr.mxu0 0.0
        %540 = vmatpush1.xpose.msra.mxu0 0.0
        %541 = vmatprep.subr.mxu0 0.0
        %542 = vmatpush1.xpose.msra.mxu0 0.0
        %543 = vmatprep.subr.mxu0 0.0
        %544 = vmatpush1.xpose.msra.mxu0 0.0
        %545 = vmatprep.subr.mxu0 0.0
        %546 = vmatpush1.xpose.msra.mxu0 0.0
        %547 = vmatprep.subr.mxu0 0.0
        %548 = vmatpush1.xpose.msra.mxu0 0.0
        %549 = vmatprep.subr.mxu0 0.0
        %550 = vmatpush1.xpose.msra.mxu0 0.0
        %551 = vmatprep.subr.mxu0 0.0
        %552 = vmatpush1.xpose.msra.mxu0 0.0
        %553 = vmatprep.subr.mxu0 0.0
        %554 = vmatpush1.xpose.msra.mxu0 0.0
        %555 = vmatprep.subr.mxu0 0.0
        %556 = vmatpush1.xpose.msra.mxu0 0.0
        %557 = vmatprep.subr.mxu0 0.0
        %558 = vmatpush1.xpose.msra.mxu0 0.0
        %559 = vmatprep.subr.mxu0 0.0
        %560 = vmatpush1.xpose.msra.mxu0 0.0
        %561 = vmatprep.subr.mxu0 0.0
        %562 = vmatpush1.xpose.msra.mxu0 0.0
        %563 = vmatprep.subr.mxu0 0.0
        %564 = vmatpush1.xpose.msra.mxu0 0.0
        %565 = vmatprep.subr.mxu0 0.0
        %566 = vmatpush1.xpose.msra.mxu0 0.0
        %567 = vmatprep.subr.mxu0 0.0
        %568 = vmatpush1.xpose.msra.mxu0 0.0
        %569 = vmatprep.subr.mxu0 0.0
        %570 = vmatpush1.xpose.msra.mxu0 0.0
        %571 = vmatprep.subr.mxu0 0.0
        %572 = vmatpush1.xpose.msra.mxu0 0.0
        %573 = vmatprep.subr.mxu0 0.0
        %574 = vmatpush1.xpose.msra.mxu0 0.0
        %575 = vmatprep.subr.mxu0 0.0
        %576 = vmatpush1.xpose.msra.mxu0 0.0
        %577 = vmatprep.subr.mxu0 0.0
        %578 = vmatpush1.xpose.msra.mxu0 0.0
        %579 = vmatprep.subr.mxu0 0.0
        %580 = vmatpush1.xpose.msra.mxu0 0.0
        %581 = vmatprep.subr.mxu0 0.0
        %582 = vmatpush1.xpose.msra.mxu0 0.0
        %583 = vmatprep.subr.mxu0 0.0
        %584 = vmatpush1.xpose.msra.mxu0 0.0
        %585 = vmatprep.subr.mxu0 0.0
        %586 = vmatpush1.xpose.msra.mxu0 0.0
        %587 = vmatprep.subr.mxu0 0.0
        %588 = vmatpush1.xpose.msra.mxu0 0.0
        %589 = vmatprep.subr.mxu0 0.0
        %590 = vmatpush1.xpose.msra.mxu0 0.0
        %591 = vmatprep.mubr.f32.mxu0 0.0
        %592 = vmatmul.mubr.f32.gmra.mrb[0].mxu0 %v523
        %v593 = vpop.f32.mrb[0].mxu0
        %v594 = vadd.f32 0.0, %v593
        %v595 = vpop.f32.mrb[0].mxu0
        %596 = vdwg.mxu0
        %v597 = vsel %vm358, %v594, -inf
        %598 = vmax.xlane.f32.xlu0 %v597
        %v599 = vpop.xlane.xlu0 %598
        %v600 = vsub.f32 %v594, %v599
        %v601 = vmul.f32 %v600, 1.442695
        %v602 = vpow.pop %v601
        %v603 = vsel %vm358, %v602, 0.0
        %604 = vadd.xlane.f32.xlu0 %v603
        %v605 = vpop.xlane.xlu0 %604
        %v608 = vsel %vm358, %v602, 0
        %610 = vmatprep.subr.mxu0 0.0
        %611 = vmatpush1.msra.mxu0 %v522
        %612 = vmatprep.subr.mxu0 0.0
        %613 = vmatpush1.msra.mxu0 0.0
        %614 = vmatprep.subr.mxu0 0.0
        %615 = vmatpush1.msra.mxu0 0.0
        %616 = vmatprep.subr.mxu0 0.0
        %617 = vmatpush1.msra.mxu0 0.0
        %618 = vmatprep.subr.mxu0 0.0
        %619 = vmatpush1.msra.mxu0 0.0
        %620 = vmatprep.subr.mxu0 0.0
        %621 = vmatpush1.msra.mxu0 0.0
        %622 = vmatprep.subr.mxu0 0.0
        %623 = vmatpush1.msra.mxu0 0.0
        %624 = vmatprep.subr.mxu0 0.0
        %625 = vmatpush1.msra.mxu0 0.0
        %626 = vmatprep.subr.mxu0 0.0
        %627 = vmatpush1.msra.mxu0 0.0
        %628 = vmatprep.subr.mxu0 0.0
        %629 = vmatpush1.msra.mxu0 0.0
        %630 = vmatprep.subr.mxu0 0.0
        %631 = vmatpush1.msra.mxu0 0.0
        %632 = vmatprep.subr.mxu0 0.0
        %633 = vmatpush1.msra.mxu0 0.0
        %634 = vmatprep.subr.mxu0 0.0
        %635 = vmatpush1.msra.mxu0 0.0
        %636 = vmatprep.subr.mxu0 0.0
        %637 = vmatpush1.msra.mxu0 0.0
        %638 = vmatprep.subr.mxu0 0.0
        %639 = vmatpush1.msra.mxu0 0.0
        %640 = vmatprep.subr.mxu0 0.0
        %641 = vmatpush1.msra.mxu0 0.0
        %642 = vmatprep.subr.mxu0 0.0
        %643 = vmatpush1.msra.mxu0 0.0
        %644 = vmatprep.subr.mxu0 0.0
        %645 = vmatpush1.msra.mxu0 0.0
        %646 = vmatprep.subr.mxu0 0.0
        %647 = vmatpush1.msra.mxu0 0.0
        %648 = vmatprep.subr.mxu0 0.0
        %649 = vmatpush1.msra.mxu0 0.0
        %650 = vmatprep.subr.mxu0 0.0
        %651 = vmatpush1.msra.mxu0 0.0
        %652 = vmatprep.subr.mxu0 0.0
        %653 = vmatpush1.msra.mxu0 0.0
        %654 = vmatprep.subr.mxu0 0.0
        %655 = vmatpush1.msra.mxu0 0.0
        %656 = vmatprep.subr.mxu0 0.0
        %657 = vmatpush1.msra.mxu0 0.0
        %658 = vmatprep.subr.mxu0 0.0
        %659 = vmatpush1.msra.mxu0 0.0
        %660 = vmatprep.subr.mxu0 0.0
        %661 = vmatpush1.msra.mxu0 0.0
        %662 = vmatprep.subr.mxu0 0.0
        %663 = vmatpush1.msra.mxu0 0.0
        %664 = vmatprep.subr.mxu0 0.0
        %665 = vmatpush1.msra.mxu0 0.0
        %666 = vmatprep.subr.mxu0 0.0
        %667 = vmatpush1.msra.mxu0 0.0
        %668 = vmatprep.subr.mxu0 0.0
        %669 = vmatpush1.msra.mxu0 0.0
        %670 = vmatprep.subr.mxu0 0.0
        %671 = vmatpush1.msra.mxu0 0.0
        %672 = vmatprep.subr.mxu0 0.0
        %673 = vmatpush1.msra.mxu0 0.0
        %674 = vmatprep.mubr.f32.mxu0 0.0
        %675 = vmatmul.mubr.f32.gmra.mrb[0].mxu0 %v608
        %v676 = vpop.f32.mrb[0].mxu0
        %v677 = vadd.f32 0.0, %v676
        %v678 = vpop.f32.mrb[0].mxu0
        %679 = vdwg.mxu0
        %v680 = vrcp.pop %v605
        %v681 = vmul.f32 %v677, %v680
        %683 = vrot.lane.b32.xlu0 %v681, 8
        %v684 = vpop.permute.xlu0 %683
        %vm686 = vcmask 130112
        %687 = vst.msk [vmem:[#allocation2] sm:$0xff] %vm686, %v684
        %688 = vrot.lane.b32.xlu0 %v352, 112
        %v689 = vpop.permute.xlu0 %688
        %690 = vrot.lane.b32.xlu0 %v352, 80
        %v691 = vpop.permute.xlu0 %690
        %v692 = vsel %vm358, %v689, 0
        %v694 = vsel %vm358, %v691, 0
        %696 = vmatprep.subr.mxu0 0.0
        %697 = vmatpush1.xpose.msra.mxu0 %v694
        %698 = vmatprep.subr.mxu0 0.0
        %699 = vmatpush1.xpose.msra.mxu0 0.0
        %700 = vmatprep.subr.mxu0 0.0
        %701 = vmatpush1.xpose.msra.mxu0 0.0
        %702 = vmatprep.subr.mxu0 0.0
        %703 = vmatpush1.xpose.msra.mxu0 0.0
        %704 = vmatprep.subr.mxu0 0.0
        %705 = vmatpush1.xpose.msra.mxu0 0.0
        %706 = vmatprep.subr.mxu0 0.0
        %707 = vmatpush1.xpose.msra.mxu0 0.0
        %708 = vmatprep.subr.mxu0 0.0
        %709 = vmatpush1.xpose.msra.mxu0 0.0
        %710 = vmatprep.subr.mxu0 0.0
        %711 = vmatpush1.xpose.msra.mxu0 0.0
        %712 = vmatprep.subr.mxu0 0.0
        %713 = vmatpush1.xpose.msra.mxu0 0.0
        %714 = vmatprep.subr.mxu0 0.0
        %715 = vmatpush1.xpose.msra.mxu0 0.0
        %716 = vmatprep.subr.mxu0 0.0
        %717 = vmatpush1.xpose.msra.mxu0 0.0
        %718 = vmatprep.subr.mxu0 0.0
        %719 = vmatpush1.xpose.msra.mxu0 0.0
        %720 = vmatprep.subr.mxu0 0.0
        %721 = vmatpush1.xpose.msra.mxu0 0.0
        %722 = vmatprep.subr.mxu0 0.0
        %723 = vmatpush1.xpose.msra.mxu0 0.0
        %724 = vmatprep.subr.mxu0 0.0
        %725 = vmatpush1.xpose.msra.mxu0 0.0
        %726 = vmatprep.subr.mxu0 0.0
        %727 = vmatpush1.xpose.msra.mxu0 0.0
        %728 = vmatprep.subr.mxu0 0.0
        %729 = vmatpush1.xpose.msra.mxu0 0.0
        %730 = vmatprep.subr.mxu0 0.0
        %731 = vmatpush1.xpose.msra.mxu0 0.0
        %732 = vmatprep.subr.mxu0 0.0
        %733 = vmatpush1.xpose.msra.mxu0 0.0
        %734 = vmatprep.subr.mxu0 0.0
        %735 = vmatpush1.xpose.msra.mxu0 0.0
        %736 = vmatprep.subr.mxu0 0.0
        %737 = vmatpush1.xpose.msra.mxu0 0.0
        %738 = vmatprep.subr.mxu0 0.0
        %739 = vmatpush1.xpose.msra.mxu0 0.0
        %740 = vmatprep.subr.mxu0 0.0
        %741 = vmatpush1.xpose.msra.mxu0 0.0
        %742 = vmatprep.subr.mxu0 0.0
        %743 = vmatpush1.xpose.msra.mxu0 0.0
        %744 = vmatprep.subr.mxu0 0.0
        %745 = vmatpush1.xpose.msra.mxu0 0.0
        %746 = vmatprep.subr.mxu0 0.0
        %747 = vmatpush1.xpose.msra.mxu0 0.0
        %748 = vmatprep.subr.mxu0 0.0
        %749 = vmatpush1.xpose.msra.mxu0 0.0
        %750 = vmatprep.subr.mxu0 0.0
        %751 = vmatpush1.xpose.msra.mxu0 0.0
        %752 = vmatprep.subr.mxu0 0.0
        %753 = vmatpush1.xpose.msra.mxu0 0.0
        %754 = vmatprep.subr.mxu0 0.0
        %755 = vmatpush1.xpose.msra.mxu0 0.0
        %756 = vmatprep.subr.mxu0 0.0
        %757 = vmatpush1.xpose.msra.mxu0 0.0
        %758 = vmatprep.subr.mxu0 0.0
        %759 = vmatpush1.xpose.msra.mxu0 0.0
        %760 = vmatprep.mubr.f32.mxu0 0.0
        %761 = vmatmul.mubr.f32.gmra.mrb[0].mxu0 %v692
        %v762 = vpop.f32.mrb[0].mxu0
        %v763 = vadd.f32 0.0, %v762
        %v764 = vpop.f32.mrb[0].mxu0
        %765 = vdwg.mxu0
        %v766 = vsel %vm358, %v763, -inf
        %767 = vmax.xlane.f32.xlu0 %v766
        %v768 = vpop.xlane.xlu0 %767
        %v769 = vsub.f32 %v763, %v768
        %v770 = vmul.f32 %v769, 1.442695
        %v771 = vpow.pop %v770
        %v772 = vsel %vm358, %v771, 0.0
        %773 = vadd.xlane.f32.xlu0 %v772
        %v774 = vpop.xlane.xlu0 %773
        %v777 = vsel %vm358, %v771, 0
        %779 = vmatprep.subr.mxu0 0.0
        %780 = vmatpush1.msra.mxu0 %v691
        %781 = vmatprep.subr.mxu0 0.0
        %782 = vmatpush1.msra.mxu0 0.0
        %783 = vmatprep.subr.mxu0 0.0
        %784 = vmatpush1.msra.mxu0 0.0
        %785 = vmatprep.subr.mxu0 0.0
        %786 = vmatpush1.msra.mxu0 0.0
        %787 = vmatprep.subr.mxu0 0.0
        %788 = vmatpush1.msra.mxu0 0.0
        %789 = vmatprep.subr.mxu0 0.0
        %790 = vmatpush1.msra.mxu0 0.0
        %791 = vmatprep.subr.mxu0 0.0
        %792 = vmatpush1.msra.mxu0 0.0
        %793 = vmatprep.subr.mxu0 0.0
        %794 = vmatpush1.msra.mxu0 0.0
        %795 = vmatprep.subr.mxu0 0.0
        %796 = vmatpush1.msra.mxu0 0.0
        %797 = vmatprep.subr.mxu0 0.0
        %798 = vmatpush1.msra.mxu0 0.0
        %799 = vmatprep.subr.mxu0 0.0
        %800 = vmatpush1.msra.mxu0 0.0
        %801 = vmatprep.subr.mxu0 0.0
        %802 = vmatpush1.msra.mxu0 0.0
        %803 = vmatprep.subr.mxu0 0.0
        %804 = vmatpush1.msra.mxu0 0.0
        %805 = vmatprep.subr.mxu0 0.0
        %806 = vmatpush1.msra.mxu0 0.0
        %807 = vmatprep.subr.mxu0 0.0
        %808 = vmatpush1.msra.mxu0 0.0
        %809 = vmatprep.subr.mxu0 0.0
        %810 = vmatpush1.msra.mxu0 0.0
        %811 = vmatprep.subr.mxu0 0.0
        %812 = vmatpush1.msra.mxu0 0.0
        %813 = vmatprep.subr.mxu0 0.0
        %814 = vmatpush1.msra.mxu0 0.0
        %815 = vmatprep.subr.mxu0 0.0
        %816 = vmatpush1.msra.mxu0 0.0
        %817 = vmatprep.subr.mxu0 0.0
        %818 = vmatpush1.msra.mxu0 0.0
        %819 = vmatprep.subr.mxu0 0.0
        %820 = vmatpush1.msra.mxu0 0.0
        %821 = vmatprep.subr.mxu0 0.0
        %822 = vmatpush1.msra.mxu0 0.0
        %823 = vmatprep.subr.mxu0 0.0
        %824 = vmatpush1.msra.mxu0 0.0
        %825 = vmatprep.subr.mxu0 0.0
        %826 = vmatpush1.msra.mxu0 0.0
        %827 = vmatprep.subr.mxu0 0.0
        %828 = vmatpush1.msra.mxu0 0.0
        %829 = vmatprep.subr.mxu0 0.0
        %830 = vmatpush1.msra.mxu0 0.0
        %831 = vmatprep.subr.mxu0 0.0
        %832 = vmatpush1.msra.mxu0 0.0
        %833 = vmatprep.subr.mxu0 0.0
        %834 = vmatpush1.msra.mxu0 0.0
        %835 = vmatprep.subr.mxu0 0.0
        %836 = vmatpush1.msra.mxu0 0.0
        %837 = vmatprep.subr.mxu0 0.0
        %838 = vmatpush1.msra.mxu0 0.0
        %839 = vmatprep.subr.mxu0 0.0
        %840 = vmatpush1.msra.mxu0 0.0
        %841 = vmatprep.subr.mxu0 0.0
        %842 = vmatpush1.msra.mxu0 0.0
        %843 = vmatprep.mubr.f32.mxu0 0.0
        %844 = vmatmul.mubr.f32.gmra.mrb[0].mxu0 %v777
        %v845 = vpop.f32.mrb[0].mxu0
        %v846 = vadd.f32 0.0, %v845
        %v847 = vpop.f32.mrb[0].mxu0
        %848 = vdwg.mxu0
        %v849 = vrcp.pop %v774
        %v850 = vmul.f32 %v846, %v849
        %852 = vrot.lane.b32.xlu0 %v850, 16
        %v853 = vpop.permute.xlu0 %852
        %vm855 = vcmask 195712
        %856 = vst.msk [vmem:[#allocation2] sm:$0xff] %vm855, %v853
        %857 = vrot.lane.b32.xlu0 %v352, 104
        %v858 = vpop.permute.xlu0 %857
        %859 = vrot.lane.b32.xlu0 %v352, 72
        %v860 = vpop.permute.xlu0 %859
        %v861 = vsel %vm358, %v858, 0
        %v863 = vsel %vm358, %v860, 0
        %865 = vmatprep.subr.mxu0 0.0
        %866 = vmatpush1.xpose.msra.mxu0 %v863
        %867 = vmatprep.subr.mxu0 0.0
        %868 = vmatpush1.xpose.msra.mxu0 0.0
        %869 = vmatprep.subr.mxu0 0.0
        %870 = vmatpush1.xpose.msra.mxu0 0.0
        %871 = vmatprep.subr.mxu0 0.0
        %872 = vmatpush1.xpose.msra.mxu0 0.0
        %873 = vmatprep.subr.mxu0 0.0
        %874 = vmatpush1.xpose.msra.mxu0 0.0
        %875 = vmatprep.subr.mxu0 0.0
        %876 = vmatpush1.xpose.msra.mxu0 0.0
        %877 = vmatprep.subr.mxu0 0.0
        %878 = vmatpush1.xpose.msra.mxu0 0.0
        %879 = vmatprep.subr.mxu0 0.0
        %880 = vmatpush1.xpose.msra.mxu0 0.0
        %881 = vmatprep.subr.mxu0 0.0
        %882 = vmatpush1.xpose.msra.mxu0 0.0
        %883 = vmatprep.subr.mxu0 0.0
        %884 = vmatpush1.xpose.msra.mxu0 0.0
        %885 = vmatprep.subr.mxu0 0.0
        %886 = vmatpush1.xpose.msra.mxu0 0.0
        %887 = vmatprep.subr.mxu0 0.0
        %888 = vmatpush1.xpose.msra.mxu0 0.0
        %889 = vmatprep.subr.mxu0 0.0
        %890 = vmatpush1.xpose.msra.mxu0 0.0
        %891 = vmatprep.subr.mxu0 0.0
        %892 = vmatpush1.xpose.msra.mxu0 0.0
        %893 = vmatprep.subr.mxu0 0.0
        %894 = vmatpush1.xpose.msra.mxu0 0.0
        %895 = vmatprep.subr.mxu0 0.0
        %896 = vmatpush1.xpose.msra.mxu0 0.0
        %897 = vmatprep.subr.mxu0 0.0
        %898 = vmatpush1.xpose.msra.mxu0 0.0
        %899 = vmatprep.subr.mxu0 0.0
        %900 = vmatpush1.xpose.msra.mxu0 0.0
        %901 = vmatprep.subr.mxu0 0.0
        %902 = vmatpush1.xpose.msra.mxu0 0.0
        %903 = vmatprep.subr.mxu0 0.0
        %904 = vmatpush1.xpose.msra.mxu0 0.0
        %905 = vmatprep.subr.mxu0 0.0
        %906 = vmatpush1.xpose.msra.mxu0 0.0
        %907 = vmatprep.subr.mxu0 0.0
        %908 = vmatpush1.xpose.msra.mxu0 0.0
        %909 = vmatprep.subr.mxu0 0.0
        %910 = vmatpush1.xpose.msra.mxu0 0.0
        %911 = vmatprep.subr.mxu0 0.0
        %912 = vmatpush1.xpose.msra.mxu0 0.0
        %913 = vmatprep.subr.mxu0 0.0
        %914 = vmatpush1.xpose.msra.mxu0 0.0
        %915 = vmatprep.subr.mxu0 0.0
        %916 = vmatpush1.xpose.msra.mxu0 0.0
        %917 = vmatprep.subr.mxu0 0.0
        %918 = vmatpush1.xpose.msra.mxu0 0.0
        %919 = vmatprep.subr.mxu0 0.0
        %920 = vmatpush1.xpose.msra.mxu0 0.0
        %921 = vmatprep.subr.mxu0 0.0
        %922 = vmatpush1.xpose.msra.mxu0 0.0
        %923 = vmatprep.subr.mxu0 0.0
        %924 = vmatpush1.xpose.msra.mxu0 0.0
        %925 = vmatprep.subr.mxu0 0.0
        %926 = vmatpush1.xpose.msra.mxu0 0.0
        %927 = vmatprep.subr.mxu0 0.0
        %928 = vmatpush1.xpose.msra.mxu0 0.0
        %929 = vmatprep.mubr.f32.mxu0 0.0
        %930 = vmatmul.mubr.f32.gmra.mrb[0].mxu0 %v861
        %v931 = vpop.f32.mrb[0].mxu0
        %v932 = vadd.f32 0.0, %v931
        %v933 = vpop.f32.mrb[0].mxu0
        %934 = vdwg.mxu0
        %v935 = vsel %vm358, %v932, -inf
        %936 = vmax.xlane.f32.xlu0 %v935
        %v937 = vpop.xlane.xlu0 %936
        %v938 = vsub.f32 %v932, %v937
        %v939 = vmul.f32 %v938, 1.442695
        %v940 = vpow.pop %v939
        %v941 = vsel %vm358, %v940, 0.0
        %942 = vadd.xlane.f32.xlu0 %v941
        %v943 = vpop.xlane.xlu0 %942
        %v946 = vsel %vm358, %v940, 0
        %948 = vmatprep.subr.mxu0 0.0
        %949 = vmatpush1.msra.mxu0 %v860
        %950 = vmatprep.subr.mxu0 0.0
        %951 = vmatpush1.msra.mxu0 0.0
        %952 = vmatprep.subr.mxu0 0.0
        %953 = vmatpush1.msra.mxu0 0.0
        %954 = vmatprep.subr.mxu0 0.0
        %955 = vmatpush1.msra.mxu0 0.0
        %956 = vmatprep.subr.mxu0 0.0
        %957 = vmatpush1.msra.mxu0 0.0
        %958 = vmatprep.subr.mxu0 0.0
        %959 = vmatpush1.msra.mxu0 0.0
        %960 = vmatprep.subr.mxu0 0.0
        %961 = vmatpush1.msra.mxu0 0.0
        %962 = vmatprep.subr.mxu0 0.0
        %963 = vmatpush1.msra.mxu0 0.0
        %964 = vmatprep.subr.mxu0 0.0
        %965 = vmatpush1.msra.mxu0 0.0
        %966 = vmatprep.subr.mxu0 0.0
        %967 = vmatpush1.msra.mxu0 0.0
        %968 = vmatprep.subr.mxu0 0.0
        %969 = vmatpush1.msra.mxu0 0.0
        %970 = vmatprep.subr.mxu0 0.0
        %971 = vmatpush1.msra.mxu0 0.0
        %972 = vmatprep.subr.mxu0 0.0
        %973 = vmatpush1.msra.mxu0 0.0
        %974 = vmatprep.subr.mxu0 0.0
        %975 = vmatpush1.msra.mxu0 0.0
        %976 = vmatprep.subr.mxu0 0.0
        %977 = vmatpush1.msra.mxu0 0.0
        %978 = vmatprep.subr.mxu0 0.0
        %979 = vmatpush1.msra.mxu0 0.0
        %980 = vmatprep.subr.mxu0 0.0
        %981 = vmatpush1.msra.mxu0 0.0
        %982 = vmatprep.subr.mxu0 0.0
        %983 = vmatpush1.msra.mxu0 0.0
        %984 = vmatprep.subr.mxu0 0.0
        %985 = vmatpush1.msra.mxu0 0.0
        %986 = vmatprep.subr.mxu0 0.0
        %987 = vmatpush1.msra.mxu0 0.0
        %988 = vmatprep.subr.mxu0 0.0
        %989 = vmatpush1.msra.mxu0 0.0
        %990 = vmatprep.subr.mxu0 0.0
        %991 = vmatpush1.msra.mxu0 0.0
        %992 = vmatprep.subr.mxu0 0.0
        %993 = vmatpush1.msra.mxu0 0.0
        %994 = vmatprep.subr.mxu0 0.0
        %995 = vmatpush1.msra.mxu0 0.0
        %996 = vmatprep.subr.mxu0 0.0
        %997 = vmatpush1.msra.mxu0 0.0
        %998 = vmatprep.subr.mxu0 0.0
        %999 = vmatpush1.msra.mxu0 0.0
        %1000 = vmatprep.subr.mxu0 0.0
        %1001 = vmatpush1.msra.mxu0 0.0
        %1002 = vmatprep.subr.mxu0 0.0
        %1003 = vmatpush1.msra.mxu0 0.0
        %1004 = vmatprep.subr.mxu0 0.0
        %1005 = vmatpush1.msra.mxu0 0.0
        %1006 = vmatprep.subr.mxu0 0.0
        %1007 = vmatpush1.msra.mxu0 0.0
        %1008 = vmatprep.subr.mxu0 0.0
        %1009 = vmatpush1.msra.mxu0 0.0
        %1010 = vmatprep.subr.mxu0 0.0
        %1011 = vmatpush1.msra.mxu0 0.0
        %1012 = vmatprep.mubr.f32.mxu0 0.0
        %1013 = vmatmul.mubr.f32.gmra.mrb[0].mxu0 %v946
        %v1014 = vpop.f32.mrb[0].mxu0
        %v1015 = vadd.f32 0.0, %v1014
        %v1016 = vpop.f32.mrb[0].mxu0
        %1017 = vdwg.mxu0
        %v1018 = vrcp.pop %v943
        %v1019 = vmul.f32 %v1015, %v1018
        %1021 = vrot.lane.b32.xlu0 %v1019, 24
        %v1022 = vpop.permute.xlu0 %1021
        %vm1024 = vcmask 261312
        %1025 = vst.msk [vmem:[#allocation2] sm:$0xff] %vm1024, %v1022
        %v1026 = vld [vmem:[#allocation2] sm:$0xff]
        %v1027 = vld [vmem:[#allocation8] sm:$0xff]
        %v1028 = vld [vmem:[#allocation8 + $0x8] sm:$0xff]
        %v1029 = vld [vmem:[#allocation8 + $0x10] sm:$0xff]
        %v1030 = vld [vmem:[#allocation8 + $0x18] sm:$0xff]
        %v1031 = vld [vmem:[%s4] sm:$0x1]
        %v1033 = vlaneseq
        %v1034 = vshrl.u32 %v1033, 7
        %v1035 = vsub.s32 0, %v1034
        %v1036 = vrot.slane %v1031, %v1035
        %v1039 = vsel %vm281, %v1026, 0
        %1041 = vmatprep.subr.mxu0 0.0
        %1042 = vmatpush1.msra.mxu0 %v1027
        %1043 = vmatprep.subr.mxu0 0.0
        %1044 = vmatpush1.msra.mxu0 %v1028
        %1045 = vmatprep.subr.mxu0 0.0
        %1046 = vmatpush1.msra.mxu0 %v1029
        %1047 = vmatprep.subr.mxu0 0.0
        %1048 = vmatpush1.msra.mxu0 %v1030
        %1049 = vmatprep.subr.mxu0 0.0
        %1050 = vmatpush1.msra.mxu0 0.0
        %1051 = vmatprep.subr.mxu0 0.0
        %1052 = vmatpush1.msra.mxu0 0.0
        %1053 = vmatprep.subr.mxu0 0.0
        %1054 = vmatpush1.msra.mxu0 0.0
        %1055 = vmatprep.subr.mxu0 0.0
        %1056 = vmatpush1.msra.mxu0 0.0
        %1057 = vmatprep.subr.mxu0 0.0
        %1058 = vmatpush1.msra.mxu0 0.0
        %1059 = vmatprep.subr.mxu0 0.0
        %1060 = vmatpush1.msra.mxu0 0.0
        %1061 = vmatprep.subr.mxu0 0.0
        %1062 = vmatpush1.msra.mxu0 0.0
        %1063 = vmatprep.subr.mxu0 0.0
        %1064 = vmatpush1.msra.mxu0 0.0
        %1065 = vmatprep.subr.mxu0 0.0
        %1066 = vmatpush1.msra.mxu0 0.0
        %1067 = vmatprep.subr.mxu0 0.0
        %1068 = vmatpush1.msra.mxu0 0.0
        %1069 = vmatprep.subr.mxu0 0.0
        %1070 = vmatpush1.msra.mxu0 0.0
        %1071 = vmatprep.subr.mxu0 0.0
        %1072 = vmatpush1.msra.mxu0 0.0
        %1073 = vmatprep.subr.mxu0 0.0
        %1074 = vmatpush1.msra.mxu0 0.0
        %1075 = vmatprep.subr.mxu0 0.0
        %1076 = vmatpush1.msra.mxu0 0.0
        %1077 = vmatprep.subr.mxu0 0.0
        %1078 = vmatpush1.msra.mxu0 0.0
        %1079 = vmatprep.subr.mxu0 0.0
        %1080 = vmatpush1.msra.mxu0 0.0
        %1081 = vmatprep.subr.mxu0 0.0
        %1082 = vmatpush1.msra.mxu0 0.0
        %1083 = vmatprep.subr.mxu0 0.0
        %1084 = vmatpush1.msra.mxu0 0.0
        %1085 = vmatprep.subr.mxu0 0.0
        %1086 = vmatpush1.msra.mxu0 0.0
        %1087 = vmatprep.subr.mxu0 0.0
        %1088 = vmatpush1.msra.mxu0 0.0
        %1089 = vmatprep.subr.mxu0 0.0
        %1090 = vmatpush1.msra.mxu0 0.0
        %1091 = vmatprep.subr.mxu0 0.0
        %1092 = vmatpush1.msra.mxu0 0.0
        %1093 = vmatprep.subr.mxu0 0.0
        %1094 = vmatpush1.msra.mxu0 0.0
        %1095 = vmatprep.subr.mxu0 0.0
        %1096 = vmatpush1.msra.mxu0 0.0
        %1097 = vmatprep.subr.mxu0 0.0
        %1098 = vmatpush1.msra.mxu0 0.0
        %1099 = vmatprep.subr.mxu0 0.0
        %1100 = vmatpush1.msra.mxu0 0.0
        %1101 = vmatprep.subr.mxu0 0.0
        %1102 = vmatpush1.msra.mxu0 0.0
        %1103 = vmatprep.subr.mxu0 0.0
        %1104 = vmatpush1.msra.mxu0 0.0
        %1105 = vmatprep.mubr.f32.mxu0 0.0
        %1106 = vmatmul.mubr.f32.gmra.mrb[0].mxu0 %v1039
        %v1107 = vpop.f32.mrb[0].mxu0
        %v1108 = vadd.f32 %v1036, %v1107
        %v1109 = vpop.f32.mrb[0].mxu0
        %1110 = vdwg.mxu0
        %1111 = vst.msk [vmem:[%s268] sm:$0xff] %vm281, %v1108
        %s1112 = sand.u32 %s141, 1
        %s1113 = scalar_lea.sflag [#allocation5], %s1112
        %s1114 = sand.u32 %s141, 1
        %s1115 = smul.addr %s1114, 8
        %s1116 = scalar_lea.vmem [#allocation9], %s1115
        // Predicated region
        $region53: #{multi_head_self_attention.1} parent=39 // pred_check
          %p1117 = pneg %p151
        $region54: #{multi_head_self_attention.1} parent=39 // pred_check_branch
          %1119 = sbr.rel (%p1117) target = $region56
        $region55: #{multi_head_self_attention.1} parent=39 // pred_region
          %s1121 = ssub.s32 128, 128
          %1122 = vsyncadd %s1113, %s1121
          %s1123 = smul.addr %s23, 128
          %s1124 = scalar_lea.hbm %s5, %s1123
          %s1126 = sshll.u32 %s1116, 4
          %s1127 = int_to_ptr.vmem [resolvable:$true] %s1126
          %1129 = dma.vmem_to_hbm [thread:$0]  %s1127, 128, %s1124, %s1113
        $region56: #{multi_head_self_attention.1} parent=39 // pred_fallthru
          _
      $region40: #{multi_head_self_attention.1} parent=5 // pred_fallthru
        _
      %p1130 = scmp.le.s32.totalorder 2, %s18
      // Predicated region
      $region57: #{multi_head_self_attention.1} parent=5 // pred_check
        %p1131 = pneg %p1130
      $region58: #{multi_head_self_attention.1} parent=5 // pred_check_branch
        %1133 = sbr.rel (%p1131) target = $region60
      $region59: #{multi_head_self_attention.1} parent=5 // pred_region
        %s1134 = ssub.s32 %s18, 2
        // Predicated region
        $region61: #{multi_head_self_attention.1} parent=59 // pred_check
          %p1135 = pneg %p157
        $region62: #{multi_head_self_attention.1} parent=59 // pred_check_branch
          %1137 = sbr.rel (%p1135) target = $region64
        $region63: #{multi_head_self_attention.1} parent=59 // pred_region
          %s1138 = sand.u32 %s142, 1
          %s1139 = scalar_lea.sflag [#allocation5], %s1138
          %s1140 = sand.u32 %s142, 1
          %s1141 = smul.addr %s1140, 8
          %s1142 = scalar_lea.vmem [#allocation9], %s1141
          %1143 = dma.done %s1139, 128
        $region64: #{multi_head_self_attention.1} parent=59 // pred_fallthru
          _
      $region60: #{multi_head_self_attention.1} parent=5 // pred_fallthru
        _
    $region6: #{multi_head_self_attention.1} parent=1 // loop_footer
      %s22 = sadd.s32 1, %s18
    $region7: #{multi_head_self_attention.1} parent=1 // loop_footer_branch
      %17 = sbr.rel target = $region3
    $region8: #{multi_head_self_attention.1} parent=1 // loop_exit
      _
    %1144 = vsyncpa [#allocation4], 1
    %s1145 = scalar_lea.sflag [#allocation4], 1
    %1146 = vsyncpa %s1145, 1
    %1147 = vsyncpa [#allocation7], 1
    %1148 = vsyncpa [#allocation5], 1
    %s1149 = scalar_lea.sflag [#allocation5], 1
    %1150 = vsyncpa %s1149, 1

</llo_original>
